<compile_context>
chip_gen: v7x
topology: tpu7x:2x2x1
jax: 0.10.0
libtpu: 0.0.40
codegen_flags: <defaults>
</compile_context>

<pallas_src>
import functools
import math

import jax
import jax.numpy as jnp
from jax.experimental import pallas as pl
from jax.experimental.pallas import tpu as pltpu

# When True, matmul operands run in bfloat16 with float32 accumulation (FC
# weights are stored bf16, activations cast per-block in-kernel).  This halves
# the bandwidth-dominant FC weight stream and uses the bf16-native MXU on the
# convs.  Set False for strict f32 numerics.
USE_BF16 = True
_CDT = jnp.bfloat16 if USE_BF16 else jnp.float32


def _vmem_limit_bytes():
    # Per-generation scoped-VMEM limit: ~3/4 of physical VMEM, capped at 96 MiB
    # (v5e/v6e: 128 MiB physical; v7x: 64 MiB per TensorCore).
    cap = None
    try:
        cap = getattr(pltpu.get_tpu_info(), "vmem_capacity_bytes", None)
    except Exception:
        cap = None
    if not cap:
        cap = 64 * 1024 * 1024
    return int(min(cap * 3 // 4, 96 * 1024 * 1024))


_VMEM_LIMIT = _vmem_limit_bytes()


def _round_up(x, m):
    return ((x + m - 1) // m) * m


def _largest_divisor_leq(n, cap):
    for t in range(min(cap, n), 0, -1):
        if n % t == 0:
            return t
    return 1


def _pick_tile(dim, cap):
    """Tile for a contraction/lane dim: the full dim if small enough, else the
    largest multiple-of-128 divisor <= cap (None if none exists)."""
    if dim <= cap:
        return dim
    t = (cap // 128) * 128
    while t >= 128:
        if dim % t == 0:
            return t
        t -= 128
    return None


# ----------------------------------------------------------------------------
# Tiled GEMM + bias (+ optional ReLU) — used by stride-2 convs (via im2col) and
# the classifier Linear layers.  A-blocks are cast to B's dtype in-kernel (so
# bf16 weights give bf16 MXU passes with f32 accumulation).
# ----------------------------------------------------------------------------
def _gemm_kernel_nk1(a_ref, b_ref, bias_ref, o_ref, *, relu):
    bv = b_ref[...]
    av = a_ref[...]
    if av.dtype != bv.dtype:
        av = av.astype(bv.dtype)
    r = jnp.dot(av, bv, preferred_element_type=jnp.float32) + bias_ref[...]
    if relu:
        r = jnp.maximum(r, 0.0)
    o_ref[...] = r.astype(o_ref.dtype)


def _gemm_kernel(a_ref, b_ref, bias_ref, o_ref, acc_ref, *, nk, relu):
    k = pl.program_id(2)

    @pl.when(k == 0)
    def _():
        acc_ref[...] = jnp.zeros_like(acc_ref)

    bv = b_ref[...]
    av = a_ref[...]
    if av.dtype != bv.dtype:
        av = av.astype(bv.dtype)
    acc_ref[...] += jnp.dot(av, bv, preferred_element_type=jnp.float32)

    @pl.when(k == nk - 1)
    def _():
        r = acc_ref[...] + bias_ref[...]
        if relu:
            r = jnp.maximum(r, 0.0)
        o_ref[...] = r.astype(o_ref.dtype)


def gemm_bias_act(a, b, bias, *, relu, tm=None, tn=None, tk=None):
    """out = act(a @ b + bias); a:(M,K) b:(K,N) bias:(N,).

    No HBM padding for the shapes used in this model: tk | K and tn | N (or the
    tile equals the full dim); the ragged M edge uses masked partial blocks.
    Note: masked edge blocks may read garbage A rows; they are never reduced
    over inside the kernel and are masked on store."""
    M, K = a.shape
    K2, N = b.shape
    assert K == K2
    itemsize = jnp.dtype(b.dtype).itemsize

    if tm is None:
        if M <= 8:
            tm = 8                                 # FC layers at tiny batch
        elif K <= 128 and N <= 128 and M >= 2048:
            tm = 2048                              # conv1 GEMM: grid-overhead bound
        elif M < 2048:
            tm = 128
        else:
            tm = 256
    if tn is None:
        if M <= 8:
            # FC path: big contiguous weight blocks; >=2 N-blocks keeps both
            # v7x TensorCores streaming their own share of the weights.
            tn = N if N <= 2048 else _pick_tile(N, 2048)
        else:
            tn = _pick_tile(N, 512)
    if tk is None:
        if M <= 8:
            # Size the (tk, tn) weight block to ~8 MiB (double-buffered ~16 MiB).
            cap = max(128, (8 * 1024 * 1024) // (max(tn if tn else 128, 1) * itemsize))
            tk = _pick_tile(K, cap)
        else:
            tk = _pick_tile(K, 2304)

    # Fallbacks (never hit by this model): pad K / N if no clean tile exists.
    if tk is None or K % tk:
        tk = tk if (tk and tk % 128 == 0) else 512
        Kp = _round_up(K, tk)
        a = jnp.pad(a, ((0, 0), (0, Kp - K)))
        b = jnp.pad(b, ((0, Kp - K), (0, 0)))
        K = Kp
    n_out = N
    if tn is None or N % tn:
        tn = tn if (tn and tn % 128 == 0) else 128
        Np = _round_up(N, tn)
        b = jnp.pad(b, ((0, 0), (0, Np - N)))
        bias = jnp.pad(bias, (0, Np - N))
        N = Np

    nk = K // tk
    if nk == 1:
        kernel = functools.partial(_gemm_kernel_nk1, relu=relu)
        scratch = []
    else:
        kernel = functools.partial(_gemm_kernel, nk=nk, relu=relu)
        scratch = [pltpu.VMEM((tm, tn), jnp.float32)]

    out = pl.pallas_call(
        kernel,
        out_shape=jax.ShapeDtypeStruct((M, N), jnp.float32),
        grid_spec=pltpu.PrefetchScalarGridSpec(
            num_scalar_prefetch=0,
            grid=(pl.cdiv(M, tm), N // tn, nk),
            in_specs=[
                pl.BlockSpec((tm, tk), lambda i, j, k: (i, k)),
                pl.BlockSpec((tk, tn), lambda i, j, k: (k, j)),
                pl.BlockSpec((1, tn), lambda i, j, k: (0, j)),
            ],
            out_specs=pl.BlockSpec((tm, tn), lambda i, j, k: (i, j)),
            scratch_shapes=scratch,
        ),
        compiler_params=pltpu.CompilerParams(
            dimension_semantics=("parallel", "parallel", "arbitrary"),
            vmem_limit_bytes=_VMEM_LIMIT),
    )(a, b, bias.reshape(1, N))
    return out if n_out == N else out[:, :n_out]


# ----------------------------------------------------------------------------
# Stride-2 convs (conv1/conv3/conv5): im2col glue + Pallas GEMM.  The im2col
# blowup for these layers is only a few MB, so the GEMM path is fine here.
# ----------------------------------------------------------------------------
def _extract_patches(x, k, stride, pad):
    N, H, W, C = x.shape
    xp = jnp.pad(x, ((0, 0), (pad, pad), (pad, pad), (0, 0)))
    Hp, Wp = H + 2 * pad, W + 2 * pad
    OH = (Hp - k) // stride + 1
    OW = (Wp - k) // stride + 1
    pieces = []
    for dy in range(k):
        for dx in range(k):
            pieces.append(
                xp[:, dy:dy + stride * (OH - 1) + 1:stride,
                      dx:dx + stride * (OW - 1) + 1:stride, :])
    return jnp.concatenate(pieces, axis=-1), OH, OW


def conv2d_im2col(x, w, b, *, stride, pad, relu=True):
    # TODO(synk): conv1's host-side im2col (C=1, channels-last) is layout-hostile
    # in XLA; a direct Pallas conv1 kernel with width-on-lanes would remove the
    # hidden relayout passes.
    kh = w.shape[0]
    cout = w.shape[-1]
    patches, OH, OW = _extract_patches(x, kh, stride, pad)
    N = x.shape[0]
    a = patches.reshape(N * OH * OW, -1)
    wm = w.reshape(-1, cout).astype(_CDT)
    y = gemm_bias_act(a, wm, b, relu=relu)
    return y.reshape(N, OH, OW, cout)


# ----------------------------------------------------------------------------
# Stride-1 convs (conv2/conv4): direct Pallas conv kernel, no materialized
# im2col.  The full padded image of one batch element is resident in VMEM.
# The KW taps are merged into one wide matmul per kernel row dy
# (weights laid out as (KH, Cin, KW*Cout)); the dx column shift of each tap's
# contribution is a static sublane roll of the row-flattened partial sum.
# ----------------------------------------------------------------------------
def _conv_s1_kernel(x_ref, w_ref, b_ref, o_ref, *, KH, KW, TH, Wpp, Cout, relu):
    # x_ref: (1, Hp, Wpp, Cin) full padded image; w_ref: (KH, Cin, KW*Cout);
    # o_ref: (1, TH*Wpp, Cout).
    Cin = x_ref.shape[-1]
    M = TH * Wpp
    row0 = pl.program_id(1) * TH
    wdt = w_ref.dtype

    # One wide matmul per kernel row: KWx fewer MXU issues/result pops and much
    # better output-lane fill than per-tap (Cin x Cout) dots.
    wide = None
    for dy in range(KH):
        # (TH, Wpp, Cin) -> (TH*Wpp, Cin); Wpp % 8 == 0 so this merge is cheap.
        xf = x_ref[0, pl.ds(row0 + dy, TH)].reshape(M, Cin).astype(wdt)
        c = jnp.dot(xf, w_ref[dy], preferred_element_type=jnp.float32)  # (M, KW*Cout)
        wide = c if wide is None else wide + c

    # out_flat[p] needs contribution_dx[p + dx]  ->  roll by -dx (mod M).
    # Wrap-around only lands in the discarded columns ox >= OW (asserted below).
    acc = wide[:, :Cout]
    for dx in range(1, KW):
        acc = acc + pltpu.roll(wide[:, dx * Cout:(dx + 1) * Cout], M - dx, axis=0)

    res = acc + b_ref[...]
    if relu:
        res = jnp.maximum(res, 0.0)
    o_ref[...] = res.reshape(o_ref.shape)


def conv2d_s1_direct(x, w, b, *, pad, relu=True, row_block=None):
    """Stride-1 conv, NHWC, direct (no materialized im2col)."""
    N, H, W, Cin = x.shape
    KH, KW, _, Cout = w.shape
    Hp, Wp = H + 2 * pad, W + 2 * pad
    OH, OW = Hp - KH + 1, Wp - KW + 1
    Wpp = _round_up(Wp, 8)           # keep width a multiple of 8 sublanes
    # Roll wrap-around must land in the discarded columns (ox >= OW):
    assert Wpp - (KW - 1) >= OW, "roll-based column shift would corrupt the right edge"
    xp = jnp.pad(x, ((0, 0), (pad, pad), (pad, pad + Wpp - Wp), (0, 0)))

    # Merge KW taps into the output dim: (KH, KW, Cin, Cout) -> (KH, Cin, KW*Cout).
    wm = jnp.transpose(w, (0, 2, 1, 3)).reshape(KH, Cin, KW * Cout).astype(_CDT)

    TH = row_block if row_block is not None else _largest_divisor_leq(OH, 32)
    assert OH % TH == 0
    R = OH // TH

    out = pl.pallas_call(
        functools.partial(_conv_s1_kernel, KH=KH, KW=KW, TH=TH, Wpp=Wpp,
                          Cout=Cout, relu=relu),
        out_shape=jax.ShapeDtypeStruct((N, OH * Wpp, Cout), jnp.float32),
        grid_spec=pltpu.PrefetchScalarGridSpec(
            num_scalar_prefetch=0,
            grid=(N, R),
            in_specs=[
                pl.BlockSpec((1, Hp, Wpp, Cin), lambda n, r: (n, 0, 0, 0)),
                pl.BlockSpec((KH, Cin, KW * Cout), lambda n, r: (0, 0, 0)),
                pl.BlockSpec((1, Cout), lambda n, r: (0, 0)),
            ],
            out_specs=pl.BlockSpec((1, TH * Wpp, Cout), lambda n, r: (n, r, 0)),
        ),
        compiler_params=pltpu.CompilerParams(
            dimension_semantics=("parallel", "parallel"),
            vmem_limit_bytes=_VMEM_LIMIT),
    )(xp, wm, b.reshape(1, Cout))
    # TODO(synk): fuse the 2x2 max-pool and the Wpp->OW crop into this kernel's
    # epilogue for conv2 to save a kernel launch and ~20-30 MB of HBM traffic.
    return out.reshape(N, OH, Wpp, Cout)[:, :, :OW, :]


# ----------------------------------------------------------------------------
# MaxPool2d(2, 2): blocked rows, W-pairs via sublane-strided reads, H-pairs via
# the explicit pair axis.  A handful of grid steps instead of one per row.
# ----------------------------------------------------------------------------
def _maxpool2x2_kernel(x_ref, o_ref):
    # x_ref: (TB, 2, W, C) -> o_ref: (TB, W//2, C)
    OW = o_ref.shape[1]
    xe = x_ref[:, :, pl.ds(0, OW, 2), :]
    xo = x_ref[:, :, pl.ds(1, OW, 2), :]
    m = jnp.maximum(xe, xo)                      # max over W pairs
    o_ref[...] = jnp.maximum(m[:, 0], m[:, 1])   # max over H pairs


def maxpool_2x2(x):
    N, H, W, C = x.shape
    OH, OW = H // 2, W // 2
    xr = x.reshape(N * OH, 2, W, C)
    TB = _largest_divisor_leq(N * OH, 16)
    out = pl.pallas_call(
        _maxpool2x2_kernel,
        out_shape=jax.ShapeDtypeStruct((N * OH, OW, C), x.dtype),
        grid_spec=pltpu.PrefetchScalarGridSpec(
            num_scalar_prefetch=0,
            grid=((N * OH) // TB,),
            in_specs=[pl.BlockSpec((TB, 2, W, C), lambda i: (i, 0, 0, 0))],
            out_specs=pl.BlockSpec((TB, OW, C), lambda i: (i, 0, 0)),
        ),
        compiler_params=pltpu.CompilerParams(
            dimension_semantics=("parallel",),
            vmem_limit_bytes=_VMEM_LIMIT),
    )(xr)
    return out.reshape(N, OH, OW, C)


# ----------------------------------------------------------------------------
# MaxPool2d(3, 2): 14x14 -> 6x6.  Columns via 3 sublane-strided reads, rows via
# a free (H//2, 2) split — whole rows written at once, no per-window stores.
# ----------------------------------------------------------------------------
def _maxpool_k3s2_kernel(x_ref, o_ref):
    OH, OW = o_ref.shape[1], o_ref.shape[2]
    C = o_ref.shape[3]
    H = x_ref.shape[1]
    mc = x_ref[:, :, pl.ds(0, OW, 2), :]
    mc = jnp.maximum(mc, x_ref[:, :, pl.ds(1, OW, 2), :])
    mc = jnp.maximum(mc, x_ref[:, :, pl.ds(2, OW, 2), :])       # (1, H, OW, C)
    mcs = mc.reshape(1, H // 2, 2, OW, C)                       # split above tile
    r0 = mcs[:, 0:OH, 0]        # rows 0, 2, ..., 2*OH-2
    r1 = mcs[:, 0:OH, 1]        # rows 1, 3, ..., 2*OH-1
    r2 = mcs[:, 1:OH + 1, 0]    # rows 2, 4, ..., 2*OH
    o_ref[...] = jnp.maximum(jnp.maximum(r0, r1), r2)


def maxpool_k3s2(x):
    N, H, W, C = x.shape
    k, s = 3, 2
    OH = (H - k) // s + 1
    OW = (W - k) // s + 1
    assert H % 2 == 0 and OH + 1 <= H // 2
    return pl.pallas_call(
        _maxpool_k3s2_kernel,
        out_shape=jax.ShapeDtypeStruct((N, OH, OW, C), x.dtype),
        grid_spec=pltpu.PrefetchScalarGridSpec(
            num_scalar_prefetch=0,
            grid=(N,),
            in_specs=[pl.BlockSpec((1, H, W, C), lambda b: (b, 0, 0, 0))],
            out_specs=pl.BlockSpec((1, OH, OW, C), lambda b: (b, 0, 0, 0)),
        ),
        compiler_params=pltpu.CompilerParams(
            dimension_semantics=("parallel",),
            vmem_limit_bytes=_VMEM_LIMIT),
    )(x)


# ----------------------------------------------------------------------------
# Parameters (deterministic synthetic init; shapes match the PyTorch module).
# Weights are stored in the matmul compute dtype (bf16 when USE_BF16) so the
# bandwidth-dominant FC weight stream is halved; biases stay f32.
# ----------------------------------------------------------------------------
def init_params(key):
    ks = jax.random.split(key, 16)

    def conv_w(k, kh, kw, cin, cout):
        w = jax.random.normal(k, (kh, kw, cin, cout), jnp.float32) / math.sqrt(kh * kw * cin)
        return w.astype(_CDT)

    def lin_w(k, fin, fout):
        w = jax.random.normal(k, (fin, fout), jnp.float32) / math.sqrt(fin)
        return w.astype(_CDT)

    def bias(k, n):
        return 0.01 * jax.random.normal(k, (n,), jnp.float32)

    p = {}
    p["w1"], p["b1"] = conv_w(ks[0], 7, 7, 1, 64), bias(ks[8], 64)
    p["w2"], p["b2"] = conv_w(ks[1], 5, 5, 64, 64), bias(ks[9], 64)
    p["w3"], p["b3"] = conv_w(ks[2], 3, 3, 64, 128), bias(ks[10], 128)
    p["w4"], p["b4"] = conv_w(ks[3], 3, 3, 128, 256), bias(ks[11], 256)
    p["w5"], p["b5"] = conv_w(ks[4], 3, 3, 256, 256), bias(ks[12], 256)
    p["fc1_w"], p["fc1_b"] = lin_w(ks[5], 256 * 6 * 6, 4096), bias(ks[13], 4096)
    p["fc2_w"], p["fc2_b"] = lin_w(ks[6], 4096, 4096), bias(ks[14], 4096)
    p["fc3_w"], p["fc3_b"] = lin_w(ks[7], 4096, 6), bias(ks[15], 6)
    return p


# ----------------------------------------------------------------------------
# Forward pass (mirrors Model.forward, eval mode)
# ----------------------------------------------------------------------------
@jax.jit
def forward(x_nchw, p):
    x = jnp.transpose(x_nchw, (0, 2, 3, 1))                          # NCHW -> NHWC
    x = conv2d_im2col(x, p["w1"], p["b1"], stride=2, pad=1)          # (N,110,110,64)
    x = conv2d_s1_direct(x, p["w2"], p["b2"], pad=1, row_block=18)   # (N,108,108,64)
    x = maxpool_2x2(x)                                               # (N,54,54,64)
    x = conv2d_im2col(x, p["w3"], p["b3"], stride=2, pad=1)          # (N,27,27,128)
    x = conv2d_s1_direct(x, p["w4"], p["b4"], pad=1, row_block=27)   # (N,27,27,256)
    x = conv2d_im2col(x, p["w5"], p["b5"], stride=2, pad=1)          # (N,14,14,256)
    x = maxpool_k3s2(x)                                              # (N,6,6,256)
    x = x.reshape(x.shape[0], -1)                                    # (N,9216)
    x = gemm_bias_act(x, p["fc1_w"], p["fc1_b"], relu=True)          # Linear + ReLU
    # nn.Dropout(): identity in eval mode
    x = gemm_bias_act(x, p["fc2_w"], p["fc2_b"], relu=True)          # Linear + ReLU
    # nn.Dropout(): identity in eval mode
    x = gemm_bias_act(x, p["fc3_w"], p["fc3_b"], relu=False)         # Linear
    return x                                                         # (N,6)


def _self_check(key):
    # Cross-check the direct stride-1 conv against the im2col+GEMM path, the
    # GEMM paths against plain-jnp, and the pool kernels (exact).
    k1, k2, k3, k4 = jax.random.split(key, 4)

    ka, kb, kc = jax.random.split(k1, 3)
    a = jax.random.normal(ka, (2, 512), jnp.float32)
    w = jax.random.normal(kb, (512, 256), jnp.float32) / math.sqrt(512)
    bb = 0.01 * jax.random.normal(kc, (256,), jnp.float32)
    ref = jnp.maximum(a @ w + bb, 0.0)
    tol = 2e-2 if USE_BF16 else 1e-4
    y1 = gemm_bias_act(a, w.astype(_CDT), bb, relu=True)           # nk == 1 path
    y2 = gemm_bias_act(a, w.astype(_CDT), bb, relu=True, tk=128)   # accumulator path
    assert bool(jnp.allclose(y1, ref, rtol=tol, atol=tol)), "gemm nk1 mismatch"
    assert bool(jnp.allclose(y2, ref, rtol=tol, atol=tol)), "gemm acc mismatch"

    xc = jax.random.normal(k1, (1, 27, 27, 128), jnp.float32)
    wc = jax.random.normal(k2, (3, 3, 128, 256), jnp.float32) / math.sqrt(9 * 128)
    bc = 0.01 * jax.random.normal(k3, (256,), jnp.float32)
    y_direct = conv2d_s1_direct(xc, wc, bc, pad=1, row_block=27)
    y_ref = conv2d_im2col(xc, wc, bc, stride=1, pad=1)
    assert bool(jnp.allclose(y_direct, y_ref, rtol=2e-3, atol=2e-3)), "direct conv mismatch"

    xp = jax.random.normal(k4, (2, 8, 8, 64), jnp.float32)
    p_ref = xp.reshape(2, 4, 2, 4, 2, 64).max(axis=(2, 4))
    assert bool(jnp.array_equal(maxpool_2x2(xp), p_ref)), "maxpool2x2 mismatch"

    xq = jax.random.normal(k4, (2, 14, 14, 256), jnp.float32)
    q_ref = jnp.stack([xq[:, dy:dy + 11:2, dx:dx + 11:2, :]
                       for dy in range(3) for dx in range(3)]).max(axis=0)
    assert bool(jnp.array_equal(maxpool_k3s2(xq), q_ref)), "maxpool3s2 mismatch"


if __name__ == "__main__":
    key = jax.random.PRNGKey(0)
    k_x, k_p, k_c = jax.random.split(key, 3)

    _self_check(k_c)

    # The classifier hard-codes 256*6*6 input features, so the spatial size must
    # be 224 (as in the original module); keep the batch small.
    x = jax.random.normal(k_x, (2, 1, 224, 224), jnp.float32)
    params = init_params(k_p)

    logits = forward(x, params)
    jax.block_until_ready(logits)
    assert logits.shape == (2, 6)
    assert bool(jnp.all(jnp.isfinite(logits)))
    print("KERNEL_OK")
</pallas_src>

<mosaic_0001>
module attributes {stable_mosaic.version = 11 : i64} {
  func.func @_gemm_kernel_nk1(%arg0: i32, %arg1: i32, %arg2: i32, %arg3: memref<8x512xf32, #tpu.memory_space<vmem>>, %arg4: memref<512x256xbf16, #tpu.memory_space<vmem>>, %arg5: memref<1x256xf32, #tpu.memory_space<vmem>>, %arg6: memref<8x256xf32, #tpu.memory_space<vmem>>) attributes {dimension_semantics = [#tpu.dimension_semantics<parallel>, #tpu.dimension_semantics<parallel>, #tpu.dimension_semantics<arbitrary>], iteration_bounds = array<i64: 1, 1, 1>, scalar_prefetch = 0 : i64, scratch_operands = 0 : i64, tpu.core_type = #tpu.core_type<tc>, window_params = [{transform_indices = @transform_0, window_bounds = array<i64: 8, 512>}, {transform_indices = @transform_1, window_bounds = array<i64: 512, 256>}, {transform_indices = @transform_2, window_bounds = array<i64: 1, 256>}, {transform_indices = @transform_3, window_bounds = array<i64: 8, 256>}]} {
    %c0 = arith.constant 0 : index
    %c0_0 = arith.constant 0 : index
    %0 = vector.load %arg4[%c0, %c0_0] : memref<512x256xbf16, #tpu.memory_space<vmem>>, vector<512x256xbf16>
    %c0_1 = arith.constant 0 : index
    %c0_2 = arith.constant 0 : index
    %1 = vector.load %arg3[%c0_1, %c0_2] : memref<8x512xf32, #tpu.memory_space<vmem>>, vector<8x512xf32>
    %2 = arith.truncf %1 : vector<8x512xf32> to vector<8x512xbf16>
    %cst = arith.constant dense<0.000000e+00> : vector<8x256xf32>
    %3 = tpu.matmul %2, %0, %cst {dimension_numbers = #tpu.dot_dimension_numbers<[1], [0], [0], [1], [0, 0, 1, 1], [], []>} : vector<8x512xbf16>, vector<512x256xbf16>, vector<8x256xf32> -> vector<8x256xf32>
    %c0_3 = arith.constant 0 : index
    %c0_4 = arith.constant 0 : index
    %4 = vector.load %arg5[%c0_3, %c0_4] : memref<1x256xf32, #tpu.memory_space<vmem>>, vector<1x256xf32>
    %5 = vector.broadcast %4 : vector<1x256xf32> to vector<8x256xf32>
    %6 = arith.addf %3, %5 : vector<8x256xf32>
    %cst_5 = arith.constant 0.000000e+00 : f32
    %7 = vector.broadcast %cst_5 : f32 to vector<8x256xf32>
    %8 = arith.maximumf %6, %7 : vector<8x256xf32>
    %c0_6 = arith.constant 0 : index
    %c0_7 = arith.constant 0 : index
    %9 = vector.load %arg6[%c0_6, %c0_7] : memref<8x256xf32, #tpu.memory_space<vmem>>, vector<8x256xf32>
    tpu.vector_store %arg6[%c0_6, %c0_7], %8 {strides = array<i32>} : memref<8x256xf32, #tpu.memory_space<vmem>>, vector<8x256xf32>,
    return
  }
  func.func @transform_0(%arg0: i32, %arg1: i32, %arg2: i32) -> (i32, i32) {
    %c0_i32 = arith.constant 0 : i32
    return %arg0, %arg2 : i32, i32
  }
  func.func @transform_1(%arg0: i32, %arg1: i32, %arg2: i32) -> (i32, i32) {
    %c0_i32 = arith.constant 0 : i32
    return %arg2, %arg1 : i32, i32
  }
  func.func @transform_2(%arg0: i32, %arg1: i32, %arg2: i32) -> (i32, i32) {
    %c0_i32 = arith.constant 0 : i32
    %c0_i32_0 = arith.constant 0 : i32
    return %c0_i32, %arg1 : i32, i32
  }
  func.func @transform_3(%arg0: i32, %arg1: i32, %arg2: i32) -> (i32, i32) {
    %c0_i32 = arith.constant 0 : i32
    return %arg0, %arg1 : i32, i32
  }
}

</mosaic_0001>

<llo_original>
// kernel: tpu_custom_call.1
$region0: #{tpu_custom_call.1}
  #allocation0 [shape = 'u32[]', space=smem, size = 0x4, offset = 0x4, fixed_abs, tag = 'smem constant byte address 0x4 - core index']
  #allocation1 [shape = 'u32[144,128]{1,0:T(1,128)}', space=vmem, size = 0x12000, scoped, tag = 'internal scratch']
  %s0 = inlined_call_operand.hbm [shape: f32[2,512], index: 0, kind: input, shape index: {}]
  %s1 = inlined_call_operand.hbm [shape: bf16[512,256], index: 1, kind: input, shape index: {}]
  %s2 = inlined_call_operand.vmem [shape: f32[1,256], index: 2, kind: input, shape index: {}]
  %s3 = inlined_call_operand.hbm [shape: f32[2,256], index: 3, kind: output, shape index: {}]
  %s4 = sld [smem:[#allocation0]]
  $region30: #{tpu_custom_call.1} parent=0
    _
  %s6 = ssub.s32 1, %s4
  %s7 = scalar_select 0, %s6, %s4
  $region1: #{tpu_custom_call.1} parent=0
    #allocation2 [shape = 'u8[16384]{0}', space=vmem, size = 0x4000, scoped, tag = 'input window, operand 0, single buffered']
    #allocation3 [shape = 's32[1]{0}', space=sflag, size = 0x4, scoped, tag = 'scoped memory for tpu_custom_call.1']
    #allocation4 [shape = 's32[1]{0}', space=sflag, size = 0x4, scoped, tag = 'scoped memory for tpu_custom_call.1']
    #allocation5 [shape = 'u8[262144]{0}', space=vmem, size = 0x40000, scoped, tag = 'input window, operand 1, single buffered']
    #allocation6 [shape = 's32[1]{0}', space=sflag, size = 0x4, scoped, tag = 'scoped memory for tpu_custom_call.1']
    #allocation7 [shape = 'u8[8192]{0}', space=vmem, size = 0x2000, scoped, tag = 'output window, operand 0, single buffered']
    %8 = vsyncpa [#allocation3], 0
    %9 = vsyncpa [#allocation6], 0
    %10 = vsyncpa [#allocation4], 0
    // Predicated region
    $region2: #{tpu_custom_call.1} parent=1 // pred_check
      _
    $region3: #{tpu_custom_call.1} parent=1 // pred_check_branch
      %12 = sbr.rel (0) target = $region5
    $region4: #{tpu_custom_call.1} parent=1 // pred_region
      %s14 = ssub.s32 512, 128
      %15 = vsyncadd [#allocation3], %s14
      %s16 = sshll.u32 [#allocation2], 4
      %s17 = int_to_ptr.vmem [resolvable:$true] %s16
      %22 = dma.hbm_to_vmem [thread:$0]  %s0, 128, %s17, [#allocation3], 128, 128, 8
    $region5: #{tpu_custom_call.1} parent=1 // pred_fallthru
      _
    // Predicated region
    $region6: #{tpu_custom_call.1} parent=1 // pred_check
      _
    $region7: #{tpu_custom_call.1} parent=1 // pred_check_branch
      %24 = sbr.rel (0) target = $region9
    $region8: #{tpu_custom_call.1} parent=1 // pred_region
      %s26 = ssub.s32 8192, 8192
      %27 = vsyncadd [#allocation6], %s26
      %s28 = sshll.u32 [#allocation5], 4
      %s29 = int_to_ptr.vmem [resolvable:$true] %s28
      %34 = dma.hbm_to_vmem [thread:$0]  %s1, 8192, %s29, [#allocation6], 128, 128, 8
    $region9: #{tpu_custom_call.1} parent=1 // pred_fallthru
      _
    // Predicated region
    $region10: #{tpu_custom_call.1} parent=1 // pred_check
      _
    $region11: #{tpu_custom_call.1} parent=1 // pred_check_branch
      %36 = sbr.rel (0) target = $region13
    $region12: #{tpu_custom_call.1} parent=1 // pred_region
      _
    $region13: #{tpu_custom_call.1} parent=1 // pred_fallthru
      _
    // Predicated region
    $region14: #{tpu_custom_call.1} parent=1 // pred_check
      _
    $region15: #{tpu_custom_call.1} parent=1 // pred_check_branch
      %38 = sbr.rel (0) target = $region17
    $region16: #{tpu_custom_call.1} parent=1 // pred_region
      %39 = dma.done [#allocation3], 512
    $region17: #{tpu_custom_call.1} parent=1 // pred_fallthru
      _
    // Predicated region
    $region18: #{tpu_custom_call.1} parent=1 // pred_check
      _
    $region19: #{tpu_custom_call.1} parent=1 // pred_check_branch
      %41 = sbr.rel (0) target = $region21
    $region20: #{tpu_custom_call.1} parent=1 // pred_region
      %42 = dma.done [#allocation6], 8192
    $region21: #{tpu_custom_call.1} parent=1 // pred_fallthru
      _
    %v43 = vld [vmem:[#allocation5] sm:$0xff]
    %v44 = vld [vmem:[#allocation5 + $0x8] sm:$0xff]
    %v45 = vld [vmem:[#allocation5 + $0x10] sm:$0xff]
    %v46 = vld [vmem:[#allocation5 + $0x18] sm:$0xff]
    %v47 = vld [vmem:[#allocation5 + $0x20] sm:$0xff]
    %v48 = vld [vmem:[#allocation5 + $0x28] sm:$0xff]
    %v49 = vld [vmem:[#allocation5 + $0x30] sm:$0xff]
    %v50 = vld [vmem:[#allocation5 + $0x38] sm:$0xff]
    %v51 = vld [vmem:[#allocation5 + $0x40] sm:$0xff]
    %v52 = vld [vmem:[#allocation5 + $0x48] sm:$0xff]
    %v53 = vld [vmem:[#allocation5 + $0x50] sm:$0xff]
    %v54 = vld [vmem:[#allocation5 + $0x58] sm:$0xff]
    %v55 = vld [vmem:[#allocation5 + $0x60] sm:$0xff]
    %v56 = vld [vmem:[#allocation5 + $0x68] sm:$0xff]
    %v57 = vld [vmem:[#allocation5 + $0x70] sm:$0xff]
    %v58 = vld [vmem:[#allocation5 + $0x78] sm:$0xff]
    %v59 = vld [vmem:[#allocation5 + $0x80] sm:$0xff]
    %v60 = vld [vmem:[#allocation5 + $0x88] sm:$0xff]
    %v61 = vld [vmem:[#allocation5 + $0x90] sm:$0xff]
    %v62 = vld [vmem:[#allocation5 + $0x98] sm:$0xff]
    %v63 = vld [vmem:[#allocation5 + $0xa0] sm:$0xff]
    %v64 = vld [vmem:[#allocation5 + $0xa8] sm:$0xff]
    %v65 = vld [vmem:[#allocation5 + $0xb0] sm:$0xff]
    %v66 = vld [vmem:[#allocation5 + $0xb8] sm:$0xff]
    %v67 = vld [vmem:[#allocation5 + $0xc0] sm:$0xff]
    %v68 = vld [vmem:[#allocation5 + $0xc8] sm:$0xff]
    %v69 = vld [vmem:[#allocation5 + $0xd0] sm:$0xff]
    %v70 = vld [vmem:[#allocation5 + $0xd8] sm:$0xff]
    %v71 = vld [vmem:[#allocation5 + $0xe0] sm:$0xff]
    %v72 = vld [vmem:[#allocation5 + $0xe8] sm:$0xff]
    %v73 = vld [vmem:[#allocation5 + $0xf0] sm:$0xff]
    %v74 = vld [vmem:[#allocation5 + $0xf8] sm:$0xff]
    %v75 = vld [vmem:[#allocation5 + $0x100] sm:$0xff]
    %v76 = vld [vmem:[#allocation5 + $0x108] sm:$0xff]
    %v77 = vld [vmem:[#allocation5 + $0x110] sm:$0xff]
    %v78 = vld [vmem:[#allocation5 + $0x118] sm:$0xff]
    %v79 = vld [vmem:[#allocation5 + $0x120] sm:$0xff]
    %v80 = vld [vmem:[#allocation5 + $0x128] sm:$0xff]
    %v81 = vld [vmem:[#allocation5 + $0x130] sm:$0xff]
    %v82 = vld [vmem:[#allocation5 + $0x138] sm:$0xff]
    %v83 = vld [vmem:[#allocation5 + $0x140] sm:$0xff]
    %v84 = vld [vmem:[#allocation5 + $0x148] sm:$0xff]
    %v85 = vld [vmem:[#allocation5 + $0x150] sm:$0xff]
    %v86 = vld [vmem:[#allocation5 + $0x158] sm:$0xff]
    %v87 = vld [vmem:[#allocation5 + $0x160] sm:$0xff]
    %v88 = vld [vmem:[#allocation5 + $0x168] sm:$0xff]
    %v89 = vld [vmem:[#allocation5 + $0x170] sm:$0xff]
    %v90 = vld [vmem:[#allocation5 + $0x178] sm:$0xff]
    %v91 = vld [vmem:[#allocation5 + $0x180] sm:$0xff]
    %v92 = vld [vmem:[#allocation5 + $0x188] sm:$0xff]
    %v93 = vld [vmem:[#allocation5 + $0x190] sm:$0xff]
    %v94 = vld [vmem:[#allocation5 + $0x198] sm:$0xff]
    %v95 = vld [vmem:[#allocation5 + $0x1a0] sm:$0xff]
    %v96 = vld [vmem:[#allocation5 + $0x1a8] sm:$0xff]
    %v97 = vld [vmem:[#allocation5 + $0x1b0] sm:$0xff]
    %v98 = vld [vmem:[#allocation5 + $0x1b8] sm:$0xff]
    %v99 = vld [vmem:[#allocation5 + $0x1c0] sm:$0xff]
    %v100 = vld [vmem:[#allocation5 + $0x1c8] sm:$0xff]
    %v101 = vld [vmem:[#allocation5 + $0x1d0] sm:$0xff]
    %v102 = vld [vmem:[#allocation5 + $0x1d8] sm:$0xff]
    %v103 = vld [vmem:[#allocation5 + $0x1e0] sm:$0xff]
    %v104 = vld [vmem:[#allocation5 + $0x1e8] sm:$0xff]
    %v105 = vld [vmem:[#allocation5 + $0x1f0] sm:$0xff]
    %v106 = vld [vmem:[#allocation5 + $0x1f8] sm:$0xff]
    %v107 = vld [vmem:[#allocation2] sm:$0xff]
    %v108 = vld [vmem:[#allocation2 + $0x8] sm:$0xff]
    %v109 = vld [vmem:[#allocation2 + $0x10] sm:$0xff]
    %v110 = vld [vmem:[#allocation2 + $0x18] sm:$0xff]
    %v115 = vcombine.low %v107, %v108
    %v116 = vcombine.high %v107, %v108
    %v117 = vcombine.low %v109, %v110
    %v118 = vcombine.high %v109, %v110
    %v120 = vunpack.c.l.s4 1983009808
    %v121 = vunpack.c.0.s8 %v120
    %v122 = vlaneseq
    %v123 = vshrl.u32 %v122, 7
    %v124 = vsub.s32 %v121, %v123
    %v125 = vrot.slane %v115, %v124
    %v127 = vunpack.c.l.s4 1983009808
    %v128 = vunpack.c.0.s8 %v127
    %v129 = vlaneseq
    %v130 = vshrl.u32 %v129, 7
    %v131 = vsub.s32 %v128, %v130
    %v132 = vrot.slane %v116, %v131
    %v134 = vunpack.c.l.s4 1983009808
    %v135 = vunpack.c.0.s8 %v134
    %v136 = vlaneseq
    %v137 = vshrl.u32 %v136, 7
    %v138 = vsub.s32 %v135, %v137
    %v139 = vrot.slane %v117, %v138
    %v141 = vunpack.c.l.s4 1983009808
    %v142 = vunpack.c.0.s8 %v141
    %v143 = vlaneseq
    %v144 = vshrl.u32 %v143, 7
    %v145 = vsub.s32 %v142, %v144
    %v146 = vrot.slane %v118, %v145
    %v147 = vcombine.low %v125, %v139
    %v148 = vcombine.high %v125, %v139
    %v149 = vcombine.low %v132, %v146
    %v150 = vcombine.high %v132, %v146
    %v155 = vpack.c.bf16 %v147, %v147
    %v156 = vpack.c.bf16 %v148, %v148
    %v157 = vpack.c.bf16 %v149, %v149
    %v158 = vpack.c.bf16 %v150, %v150
    %v159 = vld [vmem:[%s2] sm:$0x3]
    %v161 = vlaneseq
    %v162 = vshrl.u32 %v161, 7
    %v163 = vsub.s32 0, %v162
    %v164 = vrot.slane %v159, %v163
    %v165 = vlaneseq
    %v166 = vshrl.u32 %v165, 7
    %v167 = vsub.s32 1, %v166
    %v168 = vrot.slane %v159, %v167
    %v235 = vunpack.c.l.b16 %v43
    %v236 = vunpack.c.h.b16 %v43
    %v237 = vunpack.c.l.b16 %v44
    %v238 = vunpack.c.h.b16 %v44
    %v239 = vunpack.c.l.b16 %v45
    %v240 = vunpack.c.h.b16 %v45
    %v241 = vunpack.c.l.b16 %v46
    %v242 = vunpack.c.h.b16 %v46
    %v243 = vunpack.c.l.b16 %v47
    %v244 = vunpack.c.h.b16 %v47
    %v245 = vunpack.c.l.b16 %v48
    %v246 = vunpack.c.h.b16 %v48
    %v247 = vunpack.c.l.b16 %v49
    %v248 = vunpack.c.h.b16 %v49
    %v249 = vunpack.c.l.b16 %v50
    %v250 = vunpack.c.h.b16 %v50
    %v251 = vunpack.c.l.b16 %v51
    %v252 = vunpack.c.h.b16 %v51
    %v253 = vunpack.c.l.b16 %v52
    %v254 = vunpack.c.h.b16 %v52
    %v255 = vunpack.c.l.b16 %v53
    %v256 = vunpack.c.h.b16 %v53
    %v257 = vunpack.c.l.b16 %v54
    %v258 = vunpack.c.h.b16 %v54
    %v259 = vunpack.c.l.b16 %v55
    %v260 = vunpack.c.h.b16 %v55
    %v261 = vunpack.c.l.b16 %v56
    %v262 = vunpack.c.h.b16 %v56
    %v263 = vunpack.c.l.b16 %v57
    %v264 = vunpack.c.h.b16 %v57
    %v265 = vunpack.c.l.b16 %v58
    %v266 = vunpack.c.h.b16 %v58
    %v267 = vunpack.c.l.b16 %v59
    %v268 = vunpack.c.h.b16 %v59
    %v269 = vunpack.c.l.b16 %v60
    %v270 = vunpack.c.h.b16 %v60
    %v271 = vunpack.c.l.b16 %v61
    %v272 = vunpack.c.h.b16 %v61
    %v273 = vunpack.c.l.b16 %v62
    %v274 = vunpack.c.h.b16 %v62
    %v275 = vunpack.c.l.b16 %v63
    %v276 = vunpack.c.h.b16 %v63
    %v277 = vunpack.c.l.b16 %v64
    %v278 = vunpack.c.h.b16 %v64
    %v279 = vunpack.c.l.b16 %v65
    %v280 = vunpack.c.h.b16 %v65
    %v281 = vunpack.c.l.b16 %v66
    %v282 = vunpack.c.h.b16 %v66
    %v283 = vunpack.c.l.b16 %v67
    %v284 = vunpack.c.h.b16 %v67
    %v285 = vunpack.c.l.b16 %v68
    %v286 = vunpack.c.h.b16 %v68
    %v287 = vunpack.c.l.b16 %v69
    %v288 = vunpack.c.h.b16 %v69
    %v289 = vunpack.c.l.b16 %v70
    %v290 = vunpack.c.h.b16 %v70
    %v291 = vunpack.c.l.b16 %v71
    %v292 = vunpack.c.h.b16 %v71
    %v293 = vunpack.c.l.b16 %v72
    %v294 = vunpack.c.h.b16 %v72
    %v295 = vunpack.c.l.b16 %v73
    %v296 = vunpack.c.h.b16 %v73
    %v297 = vunpack.c.l.b16 %v74
    %v298 = vunpack.c.h.b16 %v74
    %v299 = vunpack.c.l.b16 %v75
    %v300 = vunpack.c.h.b16 %v75
    %v301 = vunpack.c.l.b16 %v76
    %v302 = vunpack.c.h.b16 %v76
    %v303 = vunpack.c.l.b16 %v77
    %v304 = vunpack.c.h.b16 %v77
    %v305 = vunpack.c.l.b16 %v78
    %v306 = vunpack.c.h.b16 %v78
    %v307 = vunpack.c.l.b16 %v79
    %v308 = vunpack.c.h.b16 %v79
    %v309 = vunpack.c.l.b16 %v80
    %v310 = vunpack.c.h.b16 %v80
    %v311 = vunpack.c.l.b16 %v81
    %v312 = vunpack.c.h.b16 %v81
    %v313 = vunpack.c.l.b16 %v82
    %v314 = vunpack.c.h.b16 %v82
    %v315 = vunpack.c.l.b16 %v83
    %v316 = vunpack.c.h.b16 %v83
    %v317 = vunpack.c.l.b16 %v84
    %v318 = vunpack.c.h.b16 %v84
    %v319 = vunpack.c.l.b16 %v85
    %v320 = vunpack.c.h.b16 %v85
    %v321 = vunpack.c.l.b16 %v86
    %v322 = vunpack.c.h.b16 %v86
    %v323 = vunpack.c.l.b16 %v87
    %v324 = vunpack.c.h.b16 %v87
    %v325 = vunpack.c.l.b16 %v88
    %v326 = vunpack.c.h.b16 %v88
    %v327 = vunpack.c.l.b16 %v89
    %v328 = vunpack.c.h.b16 %v89
    %v329 = vunpack.c.l.b16 %v90
    %v330 = vunpack.c.h.b16 %v90
    %v331 = vunpack.c.l.b16 %v91
    %v332 = vunpack.c.h.b16 %v91
    %v333 = vunpack.c.l.b16 %v92
    %v334 = vunpack.c.h.b16 %v92
    %v335 = vunpack.c.l.b16 %v93
    %v336 = vunpack.c.h.b16 %v93
    %v337 = vunpack.c.l.b16 %v94
    %v338 = vunpack.c.h.b16 %v94
    %v339 = vunpack.c.l.b16 %v95
    %v340 = vunpack.c.h.b16 %v95
    %v341 = vunpack.c.l.b16 %v96
    %v342 = vunpack.c.h.b16 %v96
    %v343 = vunpack.c.l.b16 %v97
    %v344 = vunpack.c.h.b16 %v97
    %v345 = vunpack.c.l.b16 %v98
    %v346 = vunpack.c.h.b16 %v98
    %v347 = vunpack.c.l.b16 %v99
    %v348 = vunpack.c.h.b16 %v99
    %v349 = vunpack.c.l.b16 %v100
    %v350 = vunpack.c.h.b16 %v100
    %v351 = vunpack.c.l.b16 %v101
    %v352 = vunpack.c.h.b16 %v101
    %v353 = vunpack.c.l.b16 %v102
    %v354 = vunpack.c.h.b16 %v102
    %v355 = vunpack.c.l.b16 %v103
    %v356 = vunpack.c.h.b16 %v103
    %v357 = vunpack.c.l.b16 %v104
    %v358 = vunpack.c.h.b16 %v104
    %v359 = vunpack.c.l.b16 %v105
    %v360 = vunpack.c.h.b16 %v105
    %v361 = vunpack.c.l.b16 %v106
    %v362 = vunpack.c.h.b16 %v106
    %v363 = vpack.c.b16 %v237, %v235
    %v364 = vpack.c.b16 %v238, %v236
    %v365 = vpack.c.b16 %v241, %v239
    %v366 = vpack.c.b16 %v242, %v240
    %v367 = vpack.c.b16 %v245, %v243
    %v368 = vpack.c.b16 %v246, %v244
    %v369 = vpack.c.b16 %v249, %v247
    %v370 = vpack.c.b16 %v250, %v248
    %v371 = vpack.c.b16 %v253, %v251
    %v372 = vpack.c.b16 %v254, %v252
    %v373 = vpack.c.b16 %v257, %v255
    %v374 = vpack.c.b16 %v258, %v256
    %v375 = vpack.c.b16 %v261, %v259
    %v376 = vpack.c.b16 %v262, %v260
    %v377 = vpack.c.b16 %v265, %v263
    %v378 = vpack.c.b16 %v266, %v264
    %v379 = vpack.c.b16 %v269, %v267
    %v380 = vpack.c.b16 %v270, %v268
    %v381 = vpack.c.b16 %v273, %v271
    %v382 = vpack.c.b16 %v274, %v272
    %v383 = vpack.c.b16 %v277, %v275
    %v384 = vpack.c.b16 %v278, %v276
    %v385 = vpack.c.b16 %v281, %v279
    %v386 = vpack.c.b16 %v282, %v280
    %v387 = vpack.c.b16 %v285, %v283
    %v388 = vpack.c.b16 %v286, %v284
    %v389 = vpack.c.b16 %v289, %v287
    %v390 = vpack.c.b16 %v290, %v288
    %v391 = vpack.c.b16 %v293, %v291
    %v392 = vpack.c.b16 %v294, %v292
    %v393 = vpack.c.b16 %v297, %v295
    %v394 = vpack.c.b16 %v298, %v296
    %v395 = vpack.c.b16 %v301, %v299
    %v396 = vpack.c.b16 %v302, %v300
    %v397 = vpack.c.b16 %v305, %v303
    %v398 = vpack.c.b16 %v306, %v304
    %v399 = vpack.c.b16 %v309, %v307
    %v400 = vpack.c.b16 %v310, %v308
    %v401 = vpack.c.b16 %v313, %v311
    %v402 = vpack.c.b16 %v314, %v312
    %v403 = vpack.c.b16 %v317, %v315
    %v404 = vpack.c.b16 %v318, %v316
    %v405 = vpack.c.b16 %v321, %v319
    %v406 = vpack.c.b16 %v322, %v320
    %v407 = vpack.c.b16 %v325, %v323
    %v408 = vpack.c.b16 %v326, %v324
    %v409 = vpack.c.b16 %v329, %v327
    %v410 = vpack.c.b16 %v330, %v328
    %v411 = vpack.c.b16 %v333, %v331
    %v412 = vpack.c.b16 %v334, %v332
    %v413 = vpack.c.b16 %v337, %v335
    %v414 = vpack.c.b16 %v338, %v336
    %v415 = vpack.c.b16 %v341, %v339
    %v416 = vpack.c.b16 %v342, %v340
    %v417 = vpack.c.b16 %v345, %v343
    %v418 = vpack.c.b16 %v346, %v344
    %v419 = vpack.c.b16 %v349, %v347
    %v420 = vpack.c.b16 %v350, %v348
    %v421 = vpack.c.b16 %v353, %v351
    %v422 = vpack.c.b16 %v354, %v352
    %v423 = vpack.c.b16 %v357, %v355
    %v424 = vpack.c.b16 %v358, %v356
    %v425 = vpack.c.b16 %v361, %v359
    %v426 = vpack.c.b16 %v362, %v360
    %491 = vmatprep.subr.bf16.mxu0 %v364
    %492 = vmatpush1.bf16.msra.mxu0 %v363
    %493 = vmatprep.subr.bf16.mxu0 %v366
    %494 = vmatpush1.bf16.msra.mxu0 %v365
    %495 = vmatprep.subr.bf16.mxu0 %v368
    %496 = vmatpush1.bf16.msra.mxu0 %v367
    %497 = vmatprep.subr.bf16.mxu0 %v370
    %498 = vmatpush1.bf16.msra.mxu0 %v369
    %499 = vmatprep.subr.bf16.mxu0 %v372
    %500 = vmatpush1.bf16.msra.mxu0 %v371
    %501 = vmatprep.subr.bf16.mxu0 %v374
    %502 = vmatpush1.bf16.msra.mxu0 %v373
    %503 = vmatprep.subr.bf16.mxu0 %v376
    %504 = vmatpush1.bf16.msra.mxu0 %v375
    %505 = vmatprep.subr.bf16.mxu0 %v378
    %506 = vmatpush1.bf16.msra.mxu0 %v377
    %507 = vmatprep.subr.bf16.mxu0 %v380
    %508 = vmatpush1.bf16.msra.mxu0 %v379
    %509 = vmatprep.subr.bf16.mxu0 %v382
    %510 = vmatpush1.bf16.msra.mxu0 %v381
    %511 = vmatprep.subr.bf16.mxu0 %v384
    %512 = vmatpush1.bf16.msra.mxu0 %v383
    %513 = vmatprep.subr.bf16.mxu0 %v386
    %514 = vmatpush1.bf16.msra.mxu0 %v385
    %515 = vmatprep.subr.bf16.mxu0 %v388
    %516 = vmatpush1.bf16.msra.mxu0 %v387
    %517 = vmatprep.subr.bf16.mxu0 %v390
    %518 = vmatpush1.bf16.msra.mxu0 %v389
    %519 = vmatprep.subr.bf16.mxu0 %v392
    %520 = vmatpush1.bf16.msra.mxu0 %v391
    %521 = vmatprep.subr.bf16.mxu0 %v394
    %522 = vmatpush1.bf16.msra.mxu0 %v393
    %523 = vmatprep.mubr.bf16.mxu0 %v156
    %524 = vmatmul.mubr.bf16.gmra.mrb[0].mxu0 %v155
    %v525 = vpop.f32.mrb[0].mxu0
    %v526 = vadd.f32 %v164, %v525
    %v527 = vpop.f32.mrb[0].mxu0
    %v528 = vadd.f32 %v168, %v527
    %v529 = vpop.f32.mrb[0].mxu0
    %v530 = vpop.f32.mrb[0].mxu0
    %531 = vdwg.mxu0
    %532 = vmatprep.subr.bf16.mxu0 %v396
    %533 = vmatpush1.bf16.msra.mxu0 %v395
    %534 = vmatprep.subr.bf16.mxu0 %v398
    %535 = vmatpush1.bf16.msra.mxu0 %v397
    %536 = vmatprep.subr.bf16.mxu0 %v400
    %537 = vmatpush1.bf16.msra.mxu0 %v399
    %538 = vmatprep.subr.bf16.mxu0 %v402
    %539 = vmatpush1.bf16.msra.mxu0 %v401
    %540 = vmatprep.subr.bf16.mxu0 %v404
    %541 = vmatpush1.bf16.msra.mxu0 %v403
    %542 = vmatprep.subr.bf16.mxu0 %v406
    %543 = vmatpush1.bf16.msra.mxu0 %v405
    %544 = vmatprep.subr.bf16.mxu0 %v408
    %545 = vmatpush1.bf16.msra.mxu0 %v407
    %546 = vmatprep.subr.bf16.mxu0 %v410
    %547 = vmatpush1.bf16.msra.mxu0 %v409
    %548 = vmatprep.subr.bf16.mxu0 %v412
    %549 = vmatpush1.bf16.msra.mxu0 %v411
    %550 = vmatprep.subr.bf16.mxu0 %v414
    %551 = vmatpush1.bf16.msra.mxu0 %v413
    %552 = vmatprep.subr.bf16.mxu0 %v416
    %553 = vmatpush1.bf16.msra.mxu0 %v415
    %554 = vmatprep.subr.bf16.mxu0 %v418
    %555 = vmatpush1.bf16.msra.mxu0 %v417
    %556 = vmatprep.subr.bf16.mxu0 %v420
    %557 = vmatpush1.bf16.msra.mxu0 %v419
    %558 = vmatprep.subr.bf16.mxu0 %v422
    %559 = vmatpush1.bf16.msra.mxu0 %v421
    %560 = vmatprep.subr.bf16.mxu0 %v424
    %561 = vmatpush1.bf16.msra.mxu0 %v423
    %562 = vmatprep.subr.bf16.mxu0 %v426
    %563 = vmatpush1.bf16.msra.mxu0 %v425
    %564 = vmatprep.mubr.bf16.mxu0 %v158
    %565 = vmatmul.mubr.bf16.gmra.mrb[0].mxu0 %v157
    %v566 = vpop.f32.mrb[0].mxu0
    %v567 = vadd.f32 %v526, %v566
    %v568 = vpop.f32.mrb[0].mxu0
    %v569 = vadd.f32 %v528, %v568
    %v570 = vpop.f32.mrb[0].mxu0
    %v571 = vpop.f32.mrb[0].mxu0
    %572 = vdwg.mxu0
    %v573 = vmax.f32 %v567, 0.0
    %v574 = vmax.f32 %v569, 0.0
    %v577 = vcombine.low %v573, %v574
    %v578 = vcombine.high %v573, %v574
    %v580 = vunpack.c.l.s4 1983009808
    %v581 = vunpack.c.0.s8 %v580
    %v582 = vlaneseq
    %v583 = vshrl.u32 %v582, 7
    %v584 = vsub.s32 %v581, %v583
    %v585 = vrot.slane %v577, %v584
    %v587 = vunpack.c.l.s4 1983009808
    %v588 = vunpack.c.0.s8 %v587
    %v589 = vlaneseq
    %v590 = vshrl.u32 %v589, 7
    %v591 = vsub.s32 %v588, %v590
    %v592 = vrot.slane %v578, %v591
    %v593 = vcombine.high %v585, %v585
    %v594 = vcombine.high %v592, %v592
    %599 = vst [vmem:[#allocation7] sm:$0xf] %v585
    %600 = vst [vmem:[#allocation7 + $0x4] sm:$0xf] %v593
    %601 = vst [vmem:[#allocation7 + $0x8] sm:$0xf] %v592
    %602 = vst [vmem:[#allocation7 + $0xc] sm:$0xf] %v594
    // Predicated region
    $region22: #{tpu_custom_call.1} parent=1 // pred_check
      _
    $region23: #{tpu_custom_call.1} parent=1 // pred_check_branch
      %604 = sbr.rel (0) target = $region25
    $region24: #{tpu_custom_call.1} parent=1 // pred_region
      %s606 = ssub.s32 256, 64
      %607 = vsyncadd [#allocation4], %s606
      %s608 = sshll.u32 [#allocation7], 4
      %s609 = int_to_ptr.vmem [resolvable:$true] %s608
      %614 = dma.vmem_to_hbm [thread:$0]  %s609, 64, %s3, [#allocation4], 64, 64, 4
    $region25: #{tpu_custom_call.1} parent=1 // pred_fallthru
      _
    // Predicated region
    $region26: #{tpu_custom_call.1} parent=1 // pred_check
      _
    $region27: #{tpu_custom_call.1} parent=1 // pred_check_branch
      %616 = sbr.rel (0) target = $region29
    $region28: #{tpu_custom_call.1} parent=1 // pred_region
      %617 = dma.done [#allocation4], 256
    $region29: #{tpu_custom_call.1} parent=1 // pred_fallthru
      _
    %618 = vsyncpa [#allocation3], 1
    %619 = vsyncpa [#allocation6], 1
    %620 = vsyncpa [#allocation4], 1

</llo_original>
